<compile_context>
chip_gen: v7x
topology: tpu7x:2x2x1
jax: 0.10.0
libtpu: 0.0.40
codegen_flags: <defaults>
</compile_context>

<pallas_src>
import jax
import jax.numpy as jnp
from jax.experimental import pallas as pl
from jax.experimental.pallas import tpu as pltpu  # noqa: F401

B = 2           # real batch
BP = 8          # batch padded to one sublane tile
L = 16          # input sequence length
C1 = 16         # downsampling_conv out channels
C2 = 32         # isometric_conv out channels
K = 3           # kernel size (both convs)
STRIDE = 2      # downsampling stride
L1 = (L - K) // STRIDE + 1   # 7 : length after downsampling conv
L2 = L1 - K + 1              # 5 : length after isometric conv

# Row layout of the packed parameter slab (P_ROWS, 128):
R_W2 = 0                 # rows [0, 48)  cols [0, 32) : conv2 weight as (K*C1, C2)
R_W1 = K * C1            # rows [48, 51) cols [0, 16) : conv1 weight as (K, C1)
R_B1 = R_W1 + K          # row 51        cols [0, 16) : conv1 bias
R_B2 = R_B1 + 1          # row 52        cols [0, 32) : conv2 bias
R_FCB = R_B2 + 1         # row 53        all lanes    : fc bias (lane-replicated)
R_FCW = 56               # rows [56, 88) all lanes    : (fc weight / L2), lane-replicated
P_ROWS = R_FCW + C2      # 88


def local_global_kernel(x_ref, p_ref, o_ref):
    x = x_ref[...]                                    # (BP, L)
    w2 = p_ref[R_W2:R_W2 + K * C1, 0:C2]              # (48, 32)
    w1 = p_ref[R_W1:R_W1 + K, 0:C1]                   # (3, 16)
    b1 = p_ref[R_B1:R_B1 + 1, 0:C1]                   # (1, 16)
    b2 = p_ref[R_B2:R_B2 + 1, 0:C2]                   # (1, 32)
    fcb = p_ref[R_FCB:R_FCB + 1, :]                   # (1, 128), all lanes equal
    fcw = p_ref[R_FCW:R_FCW + C2, :]                  # (32, 128), lane-replicated

    # --- downsampling Conv1d(1->16, k=3, s=2) + ReLU as one MXU dot ----------
    # Patch rows are t-major / batch-minor: row = t*BP + b.
    patches1 = jnp.concatenate(
        [x[:, STRIDE * t:STRIDE * t + K] for t in range(L1)], axis=0)       # (L1*BP, K)
    y1 = jnp.maximum(
        jnp.dot(patches1, w1, preferred_element_type=jnp.float32) + b1, 0.0)  # (56, 16)

    # --- isometric Conv1d(16->32, k=3, s=1) + ReLU as one MXU dot ------------
    # Three shifted, 8-row-aligned slabs of y1 concatenated along channels.
    patches2 = jnp.concatenate(
        [y1[k * BP:(k + L2) * BP, :] for k in range(K)], axis=1)            # (L2*BP, K*C1)
    z = jnp.maximum(
        jnp.dot(patches2, w2, preferred_element_type=jnp.float32) + b2, 0.0)  # (40, 32)

    # --- temporal mean (the 1/L2 scale is folded into fcw in the wrapper) ----
    # Sum of aligned (8, C2) slabs: pure VPU adds, no cross-lane reductions.
    feat = z[0:BP, :]
    for t in range(1, L2):
        feat = feat + z[t * BP:(t + 1) * BP, :]

    # --- fc Linear(32->1): lane-replicated weight -> lane-dense (8,128) store.
    # Kept in f32 for exact parity with the f32 reference; on v6e/v7x the dots
    # could take bf16 inputs with f32 accumulation if ~1e-3 drift is acceptable.
    o_ref[...] = jnp.dot(feat, fcw, preferred_element_type=jnp.float32) + fcb


def local_global_forward(x_bl, packed_params):
    """x_bl: (B, L) float32; packed_params: (P_ROWS, 128) float32 slab."""
    b = x_bl.shape[0]
    xp = jnp.zeros((BP, L), jnp.float32).at[:b, :].set(x_bl)   # pad batch to 8 rows
    out = pl.pallas_call(
        local_global_kernel,
        # Single grid step at this size; with many samples, stack them and make
        # the sample axis the leading grid dim marked "parallel" (v7x megacore).
        grid=(1,),
        in_specs=[pl.BlockSpec((BP, L), lambda i: (0, 0)),
                  pl.BlockSpec((P_ROWS, 128), lambda i: (0, 0))],
        out_specs=pl.BlockSpec((BP, 128), lambda i: (0, 0)),
        out_shape=jax.ShapeDtypeStruct((BP, 128), jnp.float32),
    )(xp, packed_params)
    return out[:b, :1]


def pack_params(w1, b1, w2, b2, fcw, fcb):
    """Pack all module parameters into one (P_ROWS, 128) f32 slab.

    w1: (C1,1,K)  b1: (C1,)  w2: (C2,C1,K)  b2: (C2,)  fcw: (1,C2)  fcb: (1,)
    """
    slab = jnp.zeros((P_ROWS, 128), jnp.float32)
    w2_mat = jnp.transpose(w2, (2, 1, 0)).reshape(K * C1, C2)   # [k*C1+cin, cout]
    slab = slab.at[R_W2:R_W2 + K * C1, 0:C2].set(w2_mat)
    w1_mat = jnp.transpose(w1.reshape(C1, K), (1, 0))           # [k, cout]
    slab = slab.at[R_W1:R_W1 + K, 0:C1].set(w1_mat)
    slab = slab.at[R_B1, 0:C1].set(b1)
    slab = slab.at[R_B2, 0:C2].set(b2)
    slab = slab.at[R_FCB, :].set(fcb[0])                        # lane-replicated fc bias
    fcw_scaled = fcw.reshape(C2, 1) / float(L2)                 # fold temporal mean 1/L2
    slab = slab.at[R_FCW:R_FCW + C2, :].set(jnp.broadcast_to(fcw_scaled, (C2, 128)))
    return slab


def reference(x_bcl, raw_params):
    """Pure-JAX reference matching the PyTorch module exactly. x_bcl: (B,1,L)."""
    w1, b1, w2, b2, fcw, fcb = raw_params
    y = jax.lax.conv_general_dilated(
        x_bcl, w1, (STRIDE,), "VALID", dimension_numbers=("NCH", "OIH", "NCH"))
    y = jax.nn.relu(y + b1.reshape(1, C1, 1))
    y = jax.lax.conv_general_dilated(
        y, w2, (1,), "VALID", dimension_numbers=("NCH", "OIH", "NCH"))
    y = jax.nn.relu(y + b2.reshape(1, C2, 1))
    f = jnp.mean(y, axis=2)                 # (B, C2)
    return f @ fcw.T + fcb                  # (B, 1)


if __name__ == "__main__":
    key = jax.random.PRNGKey(0)
    kx, k1, k2, k3, k4, k5, k6 = jax.random.split(key, 7)

    x = jax.random.normal(kx, (B, 1, L), dtype=jnp.float32)

    # Deterministic synthetic parameters (shapes from LocalGlobalModule.__init__).
    w1 = jax.random.normal(k1, (C1, 1, K), jnp.float32) * (1.0 / (1 * K) ** 0.5)
    b1 = jax.random.normal(k2, (C1,), jnp.float32) * 0.05
    w2 = jax.random.normal(k3, (C2, C1, K), jnp.float32) * (1.0 / (C1 * K) ** 0.5)
    b2 = jax.random.normal(k4, (C2,), jnp.float32) * 0.05
    fcw = jax.random.normal(k5, (1, C2), jnp.float32) * (1.0 / C2 ** 0.5)
    fcb = jax.random.normal(k6, (1,), jnp.float32) * 0.05

    slab = pack_params(w1, b1, w2, b2, fcw, fcb)

    out = local_global_forward(x.reshape(B, L), slab)
    out = jax.block_until_ready(out)

    ref = reference(x, (w1, b1, w2, b2, fcw, fcb))
    assert out.shape == (B, 1), out.shape
    assert jnp.allclose(out, ref, atol=1e-4, rtol=1e-4), (out, ref)
    print("KERNEL_OK")
</pallas_src>

<mosaic_0001>
module attributes {stable_mosaic.version = 11 : i64} {
  func.func @local_global_kernel(%arg0: i32, %arg1: memref<8x16xf32, #tpu.memory_space<vmem>>, %arg2: memref<88x128xf32, #tpu.memory_space<vmem>>, %arg3: memref<8x128xf32, #tpu.memory_space<vmem>>) attributes {dimension_semantics = [#tpu.dimension_semantics<arbitrary>], iteration_bounds = array<i64: 1>, scalar_prefetch = 0 : i64, scratch_operands = 0 : i64, tpu.core_type = #tpu.core_type<tc>, window_params = [{pipeline_mode = #tpu.pipeline_mode<synchronous>, transform_indices = @transform_0, window_bounds = array<i64: 8, 16>}, {pipeline_mode = #tpu.pipeline_mode<synchronous>, transform_indices = @transform_1, window_bounds = array<i64: 88, 128>}, {pipeline_mode = #tpu.pipeline_mode<synchronous>, transform_indices = @transform_2, window_bounds = array<i64: 8, 128>}]} {
    %c0 = arith.constant 0 : index
    %c0_0 = arith.constant 0 : index
    %0 = vector.load %arg1[%c0, %c0_0] : memref<8x16xf32, #tpu.memory_space<vmem>>, vector<8x16xf32>
    %c0_1 = arith.constant 0 : index
    %c0_2 = arith.constant 0 : index
    %1 = vector.load %arg2[%c0_1, %c0_2] : memref<88x128xf32, #tpu.memory_space<vmem>>, vector<48x32xf32>
    %c48 = arith.constant 48 : index
    %c0_3 = arith.constant 0 : index
    %2 = vector.load %arg2[%c48, %c0_3] : memref<88x128xf32, #tpu.memory_space<vmem>>, vector<3x16xf32>
    %c51 = arith.constant 51 : index
    %c0_4 = arith.constant 0 : index
    %3 = vector.load %arg2[%c51, %c0_4] : memref<88x128xf32, #tpu.memory_space<vmem>>, vector<1x16xf32>
    %c52 = arith.constant 52 : index
    %c0_5 = arith.constant 0 : index
    %4 = vector.load %arg2[%c52, %c0_5] : memref<88x128xf32, #tpu.memory_space<vmem>>, vector<1x32xf32>
    %c53 = arith.constant 53 : index
    %c0_6 = arith.constant 0 : index
    %5 = vector.load %arg2[%c53, %c0_6] : memref<88x128xf32, #tpu.memory_space<vmem>>, vector<1x128xf32>
    %c56 = arith.constant 56 : index
    %c0_7 = arith.constant 0 : index
    %6 = vector.load %arg2[%c56, %c0_7] : memref<88x128xf32, #tpu.memory_space<vmem>>, vector<32x128xf32>
    %7 = vector.extract_strided_slice %0 {offsets = [0, 0], sizes = [8, 3], strides = [1, 1]} : vector<8x16xf32> to vector<8x3xf32>
    %8 = vector.extract_strided_slice %0 {offsets = [0, 2], sizes = [8, 3], strides = [1, 1]} : vector<8x16xf32> to vector<8x3xf32>
    %9 = vector.extract_strided_slice %0 {offsets = [0, 4], sizes = [8, 3], strides = [1, 1]} : vector<8x16xf32> to vector<8x3xf32>
    %10 = vector.extract_strided_slice %0 {offsets = [0, 6], sizes = [8, 3], strides = [1, 1]} : vector<8x16xf32> to vector<8x3xf32>
    %11 = vector.extract_strided_slice %0 {offsets = [0, 8], sizes = [8, 3], strides = [1, 1]} : vector<8x16xf32> to vector<8x3xf32>
    %12 = vector.extract_strided_slice %0 {offsets = [0, 10], sizes = [8, 3], strides = [1, 1]} : vector<8x16xf32> to vector<8x3xf32>
    %13 = vector.extract_strided_slice %0 {offsets = [0, 12], sizes = [8, 3], strides = [1, 1]} : vector<8x16xf32> to vector<8x3xf32>
    %14 = tpu.concatenate %7, %8, %9, %10, %11, %12, %13 in 0 : vector<8x3xf32>, vector<8x3xf32>, vector<8x3xf32>, vector<8x3xf32>, vector<8x3xf32>, vector<8x3xf32>, vector<8x3xf32> -> vector<56x3xf32>
    %cst = arith.constant dense<0.000000e+00> : vector<56x16xf32>
    %15 = tpu.matmul %14, %2, %cst {dimension_numbers = #tpu.dot_dimension_numbers<[1], [0], [0], [1], [0, 0, 1, 1], [], []>} : vector<56x3xf32>, vector<3x16xf32>, vector<56x16xf32> -> vector<56x16xf32>
    %16 = vector.broadcast %3 : vector<1x16xf32> to vector<56x16xf32>
    %17 = arith.addf %15, %16 : vector<56x16xf32>
    %cst_8 = arith.constant 0.000000e+00 : f32
    %18 = vector.broadcast %cst_8 : f32 to vector<56x16xf32>
    %19 = arith.maximumf %17, %18 : vector<56x16xf32>
    %20 = vector.extract_strided_slice %19 {offsets = [0, 0], sizes = [40, 16], strides = [1, 1]} : vector<56x16xf32> to vector<40x16xf32>
    %21 = vector.extract_strided_slice %19 {offsets = [8, 0], sizes = [40, 16], strides = [1, 1]} : vector<56x16xf32> to vector<40x16xf32>
    %22 = vector.extract_strided_slice %19 {offsets = [16, 0], sizes = [40, 16], strides = [1, 1]} : vector<56x16xf32> to vector<40x16xf32>
    %23 = tpu.concatenate %20, %21, %22 in 1 : vector<40x16xf32>, vector<40x16xf32>, vector<40x16xf32> -> vector<40x48xf32>
    %cst_9 = arith.constant dense<0.000000e+00> : vector<40x32xf32>
    %24 = tpu.matmul %23, %1, %cst_9 {dimension_numbers = #tpu.dot_dimension_numbers<[1], [0], [0], [1], [0, 0, 1, 1], [], []>} : vector<40x48xf32>, vector<48x32xf32>, vector<40x32xf32> -> vector<40x32xf32>
    %25 = vector.broadcast %4 : vector<1x32xf32> to vector<40x32xf32>
    %26 = arith.addf %24, %25 : vector<40x32xf32>
    %cst_10 = arith.constant 0.000000e+00 : f32
    %27 = vector.broadcast %cst_10 : f32 to vector<40x32xf32>
    %28 = arith.maximumf %26, %27 : vector<40x32xf32>
    %29 = vector.extract_strided_slice %28 {offsets = [0, 0], sizes = [8, 32], strides = [1, 1]} : vector<40x32xf32> to vector<8x32xf32>
    %30 = vector.extract_strided_slice %28 {offsets = [8, 0], sizes = [8, 32], strides = [1, 1]} : vector<40x32xf32> to vector<8x32xf32>
    %31 = arith.addf %29, %30 : vector<8x32xf32>
    %32 = vector.extract_strided_slice %28 {offsets = [16, 0], sizes = [8, 32], strides = [1, 1]} : vector<40x32xf32> to vector<8x32xf32>
    %33 = arith.addf %31, %32 : vector<8x32xf32>
    %34 = vector.extract_strided_slice %28 {offsets = [24, 0], sizes = [8, 32], strides = [1, 1]} : vector<40x32xf32> to vector<8x32xf32>
    %35 = arith.addf %33, %34 : vector<8x32xf32>
    %36 = vector.extract_strided_slice %28 {offsets = [32, 0], sizes = [8, 32], strides = [1, 1]} : vector<40x32xf32> to vector<8x32xf32>
    %37 = arith.addf %35, %36 : vector<8x32xf32>
    %cst_11 = arith.constant dense<0.000000e+00> : vector<8x128xf32>
    %38 = tpu.matmul %37, %6, %cst_11 {dimension_numbers = #tpu.dot_dimension_numbers<[1], [0], [0], [1], [0, 0, 1, 1], [], []>} : vector<8x32xf32>, vector<32x128xf32>, vector<8x128xf32> -> vector<8x128xf32>
    %39 = vector.broadcast %5 : vector<1x128xf32> to vector<8x128xf32>
    %40 = arith.addf %38, %39 : vector<8x128xf32>
    %c0_12 = arith.constant 0 : index
    %c0_13 = arith.constant 0 : index
    %41 = vector.load %arg3[%c0_12, %c0_13] : memref<8x128xf32, #tpu.memory_space<vmem>>, vector<8x128xf32>
    tpu.vector_store %arg3[%c0_12, %c0_13], %40 {strides = array<i32>} : memref<8x128xf32, #tpu.memory_space<vmem>>, vector<8x128xf32>,
    return
  }
  func.func @transform_0(%arg0: i32) -> (i32, i32) {
    %c0_i32 = arith.constant 0 : i32
    %c0_i32_0 = arith.constant 0 : i32
    %c0_i32_1 = arith.constant 0 : i32
    return %c0_i32, %c0_i32_0 : i32, i32
  }
  func.func @transform_1(%arg0: i32) -> (i32, i32) {
    %c0_i32 = arith.constant 0 : i32
    %c0_i32_0 = arith.constant 0 : i32
    %c0_i32_1 = arith.constant 0 : i32
    return %c0_i32, %c0_i32_0 : i32, i32
  }
  func.func @transform_2(%arg0: i32) -> (i32, i32) {
    %c0_i32 = arith.constant 0 : i32
    %c0_i32_0 = arith.constant 0 : i32
    %c0_i32_1 = arith.constant 0 : i32
    return %c0_i32, %c0_i32_0 : i32, i32
  }
}

</mosaic_0001>

<llo_original>
// kernel: tpu_custom_call.1
$region0: #{tpu_custom_call.1}
  #allocation0 [shape = 'u32[]', space=smem, size = 0x4, offset = 0x4, fixed_abs, tag = 'smem constant byte address 0x4 - core index']
  #allocation1 [shape = 'u32[144,128]{1,0:T(1,128)}', space=vmem, size = 0x12000, scoped, tag = 'internal scratch']
  %s0 = inlined_call_operand.hbm [shape: f32[8,16], index: 0, kind: input, shape index: {}]
  %s1 = inlined_call_operand.hbm [shape: f32[88,128], index: 1, kind: input, shape index: {}]
  %s2 = inlined_call_operand.hbm [shape: f32[8,128], index: 2, kind: output, shape index: {}]
  %s3 = sld [smem:[#allocation0]]
  $region26: #{tpu_custom_call.1} parent=0
    _
  %s5 = ssub.s32 1, %s3
  %s6 = scalar_select 0, %s5, %s3
  $region1: #{tpu_custom_call.1} parent=0
    #allocation2 [shape = 'u8[4096]{0}', space=vmem, size = 0x1000, scoped, tag = 'input window, operand 0, single buffered']
    #allocation3 [shape = 's32[1]{0}', space=sflag, size = 0x4, scoped, tag = 'scoped memory for tpu_custom_call.1']
    #allocation4 [shape = 's32[1]{0}', space=sflag, size = 0x4, scoped, tag = 'scoped memory for tpu_custom_call.1']
    #allocation5 [shape = 'u8[45056]{0}', space=vmem, size = 0xb000, scoped, tag = 'input window, operand 1, single buffered']
    #allocation6 [shape = 's32[1]{0}', space=sflag, size = 0x4, scoped, tag = 'scoped memory for tpu_custom_call.1']
    #allocation7 [shape = 'u8[4096]{0}', space=vmem, size = 0x1000, scoped, tag = 'output window, operand 0, single buffered']
    %7 = vsyncpa [#allocation3], 0
    %8 = vsyncpa [#allocation6], 0
    %9 = vsyncpa [#allocation4], 0
    // Predicated region
    $region2: #{tpu_custom_call.1} parent=1 // pred_check
      _
    $region3: #{tpu_custom_call.1} parent=1 // pred_check_branch
      %11 = sbr.rel (0) target = $region5
    $region4: #{tpu_custom_call.1} parent=1 // pred_region
      %s13 = ssub.s32 128, 128
      %14 = vsyncadd [#allocation3], %s13
      %s16 = sshll.u32 [#allocation2], 4
      %s17 = int_to_ptr.vmem [resolvable:$true] %s16
      %19 = dma.hbm_to_vmem [thread:$0]  %s0, 128, %s17, [#allocation3]
    $region5: #{tpu_custom_call.1} parent=1 // pred_fallthru
      _
    // Predicated region
    $region6: #{tpu_custom_call.1} parent=1 // pred_check
      _
    $region7: #{tpu_custom_call.1} parent=1 // pred_check_branch
      %21 = sbr.rel (0) target = $region9
    $region8: #{tpu_custom_call.1} parent=1 // pred_region
      %s23 = ssub.s32 1408, 1408
      %24 = vsyncadd [#allocation6], %s23
      %s25 = sshll.u32 [#allocation5], 4
      %s26 = int_to_ptr.vmem [resolvable:$true] %s25
      %31 = dma.hbm_to_vmem [thread:$0]  %s1, 1408, %s26, [#allocation6], 128, 128, 8
    $region9: #{tpu_custom_call.1} parent=1 // pred_fallthru
      _
    // Predicated region
    $region10: #{tpu_custom_call.1} parent=1 // pred_check
      _
    $region11: #{tpu_custom_call.1} parent=1 // pred_check_branch
      %33 = sbr.rel (0) target = $region13
    $region12: #{tpu_custom_call.1} parent=1 // pred_region
      %34 = dma.done [#allocation3], 128
    $region13: #{tpu_custom_call.1} parent=1 // pred_fallthru
      _
    // Predicated region
    $region14: #{tpu_custom_call.1} parent=1 // pred_check
      _
    $region15: #{tpu_custom_call.1} parent=1 // pred_check_branch
      %36 = sbr.rel (0) target = $region17
    $region16: #{tpu_custom_call.1} parent=1 // pred_region
      %37 = dma.done [#allocation6], 1408
    $region17: #{tpu_custom_call.1} parent=1 // pred_fallthru
      _
    %v38 = vld [vmem:[#allocation2] sm:$0xff]
    %v39 = vld [vmem:[#allocation5] sm:$0xff]
    %v40 = vld [vmem:[#allocation5 + $0x8] sm:$0xff]
    %v41 = vld [vmem:[#allocation5 + $0x10] sm:$0xff]
    %v42 = vld [vmem:[#allocation5 + $0x18] sm:$0xff]
    %v43 = vld [vmem:[#allocation5 + $0x20] sm:$0xff]
    %v44 = vld [vmem:[#allocation5 + $0x28] sm:$0xff]
    %v45 = vld [vmem:[#allocation5 + $0x30] sm:$0x7]
    %v46 = vld [vmem:[#allocation5 + $0x33] sm:$0x1]
    %v47 = vld [vmem:[#allocation5 + $0x34] sm:$0x1]
    %v48 = vld [vmem:[#allocation5 + $0x35] sm:$0x1]
    %v49 = vld [vmem:[#allocation5 + $0x38] sm:$0xff]
    %v50 = vld [vmem:[#allocation5 + $0x40] sm:$0xff]
    %v51 = vld [vmem:[#allocation5 + $0x48] sm:$0xff]
    %v52 = vld [vmem:[#allocation5 + $0x50] sm:$0xff]
    %54 = vrot.lane.b32.xlu0 %v38, 126
    %v55 = vpop.permute.xlu0 %54
    %56 = vrot.lane.b32.xlu0 %v38, 124
    %v57 = vpop.permute.xlu0 %56
    %58 = vrot.lane.b32.xlu0 %v38, 122
    %v59 = vpop.permute.xlu0 %58
    %60 = vrot.lane.b32.xlu0 %v38, 120
    %v61 = vpop.permute.xlu0 %60
    %62 = vrot.lane.b32.xlu0 %v38, 118
    %v63 = vpop.permute.xlu0 %62
    %64 = vrot.lane.b32.xlu0 %v38, 116
    %v65 = vpop.permute.xlu0 %64
    %v66 = vlaneseq
    %v67 = vshrl.u32 %v66, 7
    %v68 = vsub.s32 0, %v67
    %v69 = vrot.slane %v46, %v68
    %vm70 = vcmask 23552
    %v71 = vsel %vm70, %v38, 0
    %v73 = vsel %vm70, %v55, 0
    %v75 = vsel %vm70, %v57, 0
    %v77 = vsel %vm70, %v59, 0
    %v79 = vsel %vm70, %v61, 0
    %v81 = vsel %vm70, %v63, 0
    %v83 = vsel %vm70, %v65, 0
    %vm85 = vcmask 1042432
    %v87 = vsel %vm85, %v45, 0
    %89 = vmatprep.subr.mxu0 0.0
    %90 = vmatpush1.msra.mxu0 %v87
    %91 = vmatprep.subr.mxu0 0.0
    %92 = vmatpush1.msra.mxu0 0.0
    %93 = vmatprep.subr.mxu0 0.0
    %94 = vmatpush1.msra.mxu0 0.0
    %95 = vmatprep.subr.mxu0 0.0
    %96 = vmatpush1.msra.mxu0 0.0
    %97 = vmatprep.subr.mxu0 0.0
    %98 = vmatpush1.msra.mxu0 0.0
    %99 = vmatprep.subr.mxu0 0.0
    %100 = vmatpush1.msra.mxu0 0.0
    %101 = vmatprep.subr.mxu0 0.0
    %102 = vmatpush1.msra.mxu0 0.0
    %103 = vmatprep.subr.mxu0 0.0
    %104 = vmatpush1.msra.mxu0 0.0
    %105 = vmatprep.subr.mxu0 0.0
    %106 = vmatpush1.msra.mxu0 0.0
    %107 = vmatprep.subr.mxu0 0.0
    %108 = vmatpush1.msra.mxu0 0.0
    %109 = vmatprep.subr.mxu0 0.0
    %110 = vmatpush1.msra.mxu0 0.0
    %111 = vmatprep.subr.mxu0 0.0
    %112 = vmatpush1.msra.mxu0 0.0
    %113 = vmatprep.subr.mxu0 0.0
    %114 = vmatpush1.msra.mxu0 0.0
    %115 = vmatprep.subr.mxu0 0.0
    %116 = vmatpush1.msra.mxu0 0.0
    %117 = vmatprep.subr.mxu0 0.0
    %118 = vmatpush1.msra.mxu0 0.0
    %119 = vmatprep.subr.mxu0 0.0
    %120 = vmatpush1.msra.mxu0 0.0
    %121 = vmatprep.subr.mxu0 0.0
    %122 = vmatpush1.msra.mxu0 0.0
    %123 = vmatprep.subr.mxu0 0.0
    %124 = vmatpush1.msra.mxu0 0.0
    %125 = vmatprep.subr.mxu0 0.0
    %126 = vmatpush1.msra.mxu0 0.0
    %127 = vmatprep.subr.mxu0 0.0
    %128 = vmatpush1.msra.mxu0 0.0
    %129 = vmatprep.subr.mxu0 0.0
    %130 = vmatpush1.msra.mxu0 0.0
    %131 = vmatprep.subr.mxu0 0.0
    %132 = vmatpush1.msra.mxu0 0.0
    %133 = vmatprep.subr.mxu0 0.0
    %134 = vmatpush1.msra.mxu0 0.0
    %135 = vmatprep.subr.mxu0 0.0
    %136 = vmatpush1.msra.mxu0 0.0
    %137 = vmatprep.subr.mxu0 0.0
    %138 = vmatpush1.msra.mxu0 0.0
    %139 = vmatprep.subr.mxu0 0.0
    %140 = vmatpush1.msra.mxu0 0.0
    %141 = vmatprep.subr.mxu0 0.0
    %142 = vmatpush1.msra.mxu0 0.0
    %143 = vmatprep.subr.mxu0 0.0
    %144 = vmatpush1.msra.mxu0 0.0
    %145 = vmatprep.subr.mxu0 0.0
    %146 = vmatpush1.msra.mxu0 0.0
    %147 = vmatprep.subr.mxu0 0.0
    %148 = vmatpush1.msra.mxu0 0.0
    %149 = vmatprep.subr.mxu0 0.0
    %150 = vmatpush1.msra.mxu0 0.0
    %151 = vmatprep.subr.mxu0 0.0
    %152 = vmatpush1.msra.mxu0 0.0
    %153 = vmatprep.mubr.f32.mxu0 0.0
    %154 = vmatmul.mubr.f32.gmra.mrb[0].mxu0 %v71
    %v155 = vpop.f32.mrb[0].mxu0
    %v156 = vadd.f32 %v69, %v155
    %v157 = vpop.f32.mrb[0].mxu0
    %158 = vmatprep.mubr.f32.mxu0 0.0
    %159 = vmatmul.mubr.f32.gmra.mrb[0].mxu0 %v73
    %v160 = vpop.f32.mrb[0].mxu0
    %v161 = vadd.f32 %v69, %v160
    %v162 = vpop.f32.mrb[0].mxu0
    %163 = vmatprep.mubr.f32.mxu0 0.0
    %164 = vmatmul.mubr.f32.gmra.mrb[0].mxu0 %v75
    %v165 = vpop.f32.mrb[0].mxu0
    %v166 = vadd.f32 %v69, %v165
    %v167 = vpop.f32.mrb[0].mxu0
    %168 = vmatprep.mubr.f32.mxu0 0.0
    %169 = vmatmul.mubr.f32.gmra.mrb[0].mxu0 %v77
    %v170 = vpop.f32.mrb[0].mxu0
    %v171 = vadd.f32 %v69, %v170
    %v172 = vpop.f32.mrb[0].mxu0
    %173 = vmatprep.mubr.f32.mxu0 0.0
    %174 = vmatmul.mubr.f32.gmra.mrb[0].mxu0 %v79
    %v175 = vpop.f32.mrb[0].mxu0
    %v176 = vadd.f32 %v69, %v175
    %v177 = vpop.f32.mrb[0].mxu0
    %178 = vmatprep.mubr.f32.mxu0 0.0
    %179 = vmatmul.mubr.f32.gmra.mrb[0].mxu0 %v81
    %v180 = vpop.f32.mrb[0].mxu0
    %v181 = vadd.f32 %v69, %v180
    %v182 = vpop.f32.mrb[0].mxu0
    %183 = vmatprep.mubr.f32.mxu0 0.0
    %184 = vmatmul.mubr.f32.gmra.mrb[0].mxu0 %v83
    %v185 = vpop.f32.mrb[0].mxu0
    %v186 = vadd.f32 %v69, %v185
    %v187 = vpop.f32.mrb[0].mxu0
    %188 = vdwg.mxu0
    %v189 = vmax.f32 %v156, 0.0
    %v190 = vmax.f32 %v161, 0.0
    %v191 = vmax.f32 %v166, 0.0
    %v192 = vmax.f32 %v171, 0.0
    %v193 = vmax.f32 %v176, 0.0
    %v194 = vmax.f32 %v181, 0.0
    %v195 = vmax.f32 %v186, 0.0
    %201 = vrot.lane.b32.xlu0 %v190, 16
    %v202 = vpop.permute.xlu0 %201
    %203 = vrot.lane.b32.xlu0 %v191, 16
    %v204 = vpop.permute.xlu0 %203
    %205 = vrot.lane.b32.xlu0 %v192, 16
    %v206 = vpop.permute.xlu0 %205
    %207 = vrot.lane.b32.xlu0 %v193, 16
    %v208 = vpop.permute.xlu0 %207
    %209 = vrot.lane.b32.xlu0 %v194, 16
    %v210 = vpop.permute.xlu0 %209
    %217 = vrot.lane.b32.xlu0 %v191, 32
    %v218 = vpop.permute.xlu0 %217
    %219 = vrot.lane.b32.xlu0 %v192, 32
    %v220 = vpop.permute.xlu0 %219
    %221 = vrot.lane.b32.xlu0 %v193, 32
    %v222 = vpop.permute.xlu0 %221
    %223 = vrot.lane.b32.xlu0 %v194, 32
    %v224 = vpop.permute.xlu0 %223
    %225 = vrot.lane.b32.xlu0 %v195, 32
    %v226 = vpop.permute.xlu0 %225
    %vm232 = vcmask 130048
    %v233 = vsel %vm232, %v189, %v202
    %v234 = vsel %vm232, %v190, %v204
    %v235 = vsel %vm232, %v191, %v206
    %v236 = vsel %vm232, %v192, %v208
    %v237 = vsel %vm232, %v193, %v210
    %vm238 = vcmask 261120
    %v239 = vsel %vm238, %v233, %v218
    %v240 = vsel %vm238, %v234, %v220
    %v241 = vsel %vm238, %v235, %v222
    %v242 = vsel %vm238, %v236, %v224
    %v243 = vsel %vm238, %v237, %v226
    %v244 = vlaneseq
    %v245 = vshrl.u32 %v244, 7
    %v246 = vsub.s32 0, %v245
    %v247 = vrot.slane %v47, %v246
    %vm248 = vcmask 392192
    %v250 = vsel %vm248, %v239, 0
    %v253 = vsel %vm248, %v240, 0
    %v256 = vsel %vm248, %v241, 0
    %v259 = vsel %vm248, %v242, 0
    %v262 = vsel %vm248, %v243, 0
    %264 = vmatprep.subr.mxu0 0.0
    %265 = vmatpush1.msra.mxu0 %v39
    %266 = vmatprep.subr.mxu0 0.0
    %267 = vmatpush1.msra.mxu0 %v40
    %268 = vmatprep.subr.mxu0 0.0
    %269 = vmatpush1.msra.mxu0 %v41
    %270 = vmatprep.subr.mxu0 0.0
    %271 = vmatpush1.msra.mxu0 %v42
    %272 = vmatprep.subr.mxu0 0.0
    %273 = vmatpush1.msra.mxu0 %v43
    %274 = vmatprep.subr.mxu0 0.0
    %275 = vmatpush1.msra.mxu0 %v44
    %276 = vmatprep.subr.mxu0 0.0
    %277 = vmatpush1.msra.mxu0 0.0
    %278 = vmatprep.subr.mxu0 0.0
    %279 = vmatpush1.msra.mxu0 0.0
    %280 = vmatprep.subr.mxu0 0.0
    %281 = vmatpush1.msra.mxu0 0.0
    %282 = vmatprep.subr.mxu0 0.0
    %283 = vmatpush1.msra.mxu0 0.0
    %284 = vmatprep.subr.mxu0 0.0
    %285 = vmatpush1.msra.mxu0 0.0
    %286 = vmatprep.subr.mxu0 0.0
    %287 = vmatpush1.msra.mxu0 0.0
    %288 = vmatprep.subr.mxu0 0.0
    %289 = vmatpush1.msra.mxu0 0.0
    %290 = vmatprep.subr.mxu0 0.0
    %291 = vmatpush1.msra.mxu0 0.0
    %292 = vmatprep.subr.mxu0 0.0
    %293 = vmatpush1.msra.mxu0 0.0
    %294 = vmatprep.subr.mxu0 0.0
    %295 = vmatpush1.msra.mxu0 0.0
    %296 = vmatprep.subr.mxu0 0.0
    %297 = vmatpush1.msra.mxu0 0.0
    %298 = vmatprep.subr.mxu0 0.0
    %299 = vmatpush1.msra.mxu0 0.0
    %300 = vmatprep.subr.mxu0 0.0
    %301 = vmatpush1.msra.mxu0 0.0
    %302 = vmatprep.subr.mxu0 0.0
    %303 = vmatpush1.msra.mxu0 0.0
    %304 = vmatprep.subr.mxu0 0.0
    %305 = vmatpush1.msra.mxu0 0.0
    %306 = vmatprep.subr.mxu0 0.0
    %307 = vmatpush1.msra.mxu0 0.0
    %308 = vmatprep.subr.mxu0 0.0
    %309 = vmatpush1.msra.mxu0 0.0
    %310 = vmatprep.subr.mxu0 0.0
    %311 = vmatpush1.msra.mxu0 0.0
    %312 = vmatprep.subr.mxu0 0.0
    %313 = vmatpush1.msra.mxu0 0.0
    %314 = vmatprep.subr.mxu0 0.0
    %315 = vmatpush1.msra.mxu0 0.0
    %316 = vmatprep.subr.mxu0 0.0
    %317 = vmatpush1.msra.mxu0 0.0
    %318 = vmatprep.subr.mxu0 0.0
    %319 = vmatpush1.msra.mxu0 0.0
    %320 = vmatprep.subr.mxu0 0.0
    %321 = vmatpush1.msra.mxu0 0.0
    %322 = vmatprep.subr.mxu0 0.0
    %323 = vmatpush1.msra.mxu0 0.0
    %324 = vmatprep.subr.mxu0 0.0
    %325 = vmatpush1.msra.mxu0 0.0
    %326 = vmatprep.subr.mxu0 0.0
    %327 = vmatpush1.msra.mxu0 0.0
    %328 = vmatprep.mubr.f32.mxu0 0.0
    %329 = vmatmul.mubr.f32.gmra.mrb[0].mxu0 %v250
    %v330 = vpop.f32.mrb[0].mxu0
    %v331 = vadd.f32 %v247, %v330
    %v332 = vpop.f32.mrb[0].mxu0
    %333 = vmatprep.mubr.f32.mxu0 0.0
    %334 = vmatmul.mubr.f32.gmra.mrb[0].mxu0 %v253
    %v335 = vpop.f32.mrb[0].mxu0
    %v336 = vadd.f32 %v247, %v335
    %v337 = vpop.f32.mrb[0].mxu0
    %338 = vmatprep.mubr.f32.mxu0 0.0
    %339 = vmatmul.mubr.f32.gmra.mrb[0].mxu0 %v256
    %v340 = vpop.f32.mrb[0].mxu0
    %v341 = vadd.f32 %v247, %v340
    %v342 = vpop.f32.mrb[0].mxu0
    %343 = vmatprep.mubr.f32.mxu0 0.0
    %344 = vmatmul.mubr.f32.gmra.mrb[0].mxu0 %v259
    %v345 = vpop.f32.mrb[0].mxu0
    %v346 = vadd.f32 %v247, %v345
    %v347 = vpop.f32.mrb[0].mxu0
    %348 = vmatprep.mubr.f32.mxu0 0.0
    %349 = vmatmul.mubr.f32.gmra.mrb[0].mxu0 %v262
    %v350 = vpop.f32.mrb[0].mxu0
    %v351 = vadd.f32 %v247, %v350
    %v352 = vpop.f32.mrb[0].mxu0
    %353 = vdwg.mxu0
    %v354 = vmax.f32 %v331, 0.0
    %v355 = vmax.f32 %v336, 0.0
    %v356 = vmax.f32 %v341, 0.0
    %v357 = vmax.f32 %v346, 0.0
    %v358 = vmax.f32 %v351, 0.0
    %v359 = vadd.f32 %v354, %v355
    %v360 = vadd.f32 %v359, %v356
    %v361 = vadd.f32 %v360, %v357
    %v362 = vadd.f32 %v361, %v358
    %v363 = vlaneseq
    %v364 = vshrl.u32 %v363, 7
    %v365 = vsub.s32 0, %v364
    %v366 = vrot.slane %v48, %v365
    %v368 = vsel %vm238, %v362, 0
    %370 = vmatprep.subr.mxu0 0.0
    %371 = vmatpush1.msra.mxu0 %v49
    %372 = vmatprep.subr.mxu0 0.0
    %373 = vmatpush1.msra.mxu0 %v50
    %374 = vmatprep.subr.mxu0 0.0
    %375 = vmatpush1.msra.mxu0 %v51
    %376 = vmatprep.subr.mxu0 0.0
    %377 = vmatpush1.msra.mxu0 %v52
    %378 = vmatprep.subr.mxu0 0.0
    %379 = vmatpush1.msra.mxu0 0.0
    %380 = vmatprep.subr.mxu0 0.0
    %381 = vmatpush1.msra.mxu0 0.0
    %382 = vmatprep.subr.mxu0 0.0
    %383 = vmatpush1.msra.mxu0 0.0
    %384 = vmatprep.subr.mxu0 0.0
    %385 = vmatpush1.msra.mxu0 0.0
    %386 = vmatprep.subr.mxu0 0.0
    %387 = vmatpush1.msra.mxu0 0.0
    %388 = vmatprep.subr.mxu0 0.0
    %389 = vmatpush1.msra.mxu0 0.0
    %390 = vmatprep.subr.mxu0 0.0
    %391 = vmatpush1.msra.mxu0 0.0
    %392 = vmatprep.subr.mxu0 0.0
    %393 = vmatpush1.msra.mxu0 0.0
    %394 = vmatprep.subr.mxu0 0.0
    %395 = vmatpush1.msra.mxu0 0.0
    %396 = vmatprep.subr.mxu0 0.0
    %397 = vmatpush1.msra.mxu0 0.0
    %398 = vmatprep.subr.mxu0 0.0
    %399 = vmatpush1.msra.mxu0 0.0
    %400 = vmatprep.subr.mxu0 0.0
    %401 = vmatpush1.msra.mxu0 0.0
    %402 = vmatprep.subr.mxu0 0.0
    %403 = vmatpush1.msra.mxu0 0.0
    %404 = vmatprep.subr.mxu0 0.0
    %405 = vmatpush1.msra.mxu0 0.0
    %406 = vmatprep.subr.mxu0 0.0
    %407 = vmatpush1.msra.mxu0 0.0
    %408 = vmatprep.subr.mxu0 0.0
    %409 = vmatpush1.msra.mxu0 0.0
    %410 = vmatprep.subr.mxu0 0.0
    %411 = vmatpush1.msra.mxu0 0.0
    %412 = vmatprep.subr.mxu0 0.0
    %413 = vmatpush1.msra.mxu0 0.0
    %414 = vmatprep.subr.mxu0 0.0
    %415 = vmatpush1.msra.mxu0 0.0
    %416 = vmatprep.subr.mxu0 0.0
    %417 = vmatpush1.msra.mxu0 0.0
    %418 = vmatprep.subr.mxu0 0.0
    %419 = vmatpush1.msra.mxu0 0.0
    %420 = vmatprep.subr.mxu0 0.0
    %421 = vmatpush1.msra.mxu0 0.0
    %422 = vmatprep.subr.mxu0 0.0
    %423 = vmatpush1.msra.mxu0 0.0
    %424 = vmatprep.subr.mxu0 0.0
    %425 = vmatpush1.msra.mxu0 0.0
    %426 = vmatprep.subr.mxu0 0.0
    %427 = vmatpush1.msra.mxu0 0.0
    %428 = vmatprep.subr.mxu0 0.0
    %429 = vmatpush1.msra.mxu0 0.0
    %430 = vmatprep.subr.mxu0 0.0
    %431 = vmatpush1.msra.mxu0 0.0
    %432 = vmatprep.subr.mxu0 0.0
    %433 = vmatpush1.msra.mxu0 0.0
    %434 = vmatprep.mubr.f32.mxu0 0.0
    %435 = vmatmul.mubr.f32.gmra.mrb[0].mxu0 %v368
    %v436 = vpop.f32.mrb[0].mxu0
    %v437 = vadd.f32 %v366, %v436
    %v438 = vpop.f32.mrb[0].mxu0
    %439 = vdwg.mxu0
    %440 = vst [vmem:[#allocation7] sm:$0xff] %v437
    // Predicated region
    $region18: #{tpu_custom_call.1} parent=1 // pred_check
      _
    $region19: #{tpu_custom_call.1} parent=1 // pred_check_branch
      %442 = sbr.rel (0) target = $region21
    $region20: #{tpu_custom_call.1} parent=1 // pred_region
      %s444 = ssub.s32 128, 128
      %445 = vsyncadd [#allocation4], %s444
      %s447 = sshll.u32 [#allocation7], 4
      %s448 = int_to_ptr.vmem [resolvable:$true] %s447
      %450 = dma.vmem_to_hbm [thread:$0]  %s448, 128, %s2, [#allocation4]
    $region21: #{tpu_custom_call.1} parent=1 // pred_fallthru
      _
    // Predicated region
    $region22: #{tpu_custom_call.1} parent=1 // pred_check
      _
    $region23: #{tpu_custom_call.1} parent=1 // pred_check_branch
      %452 = sbr.rel (0) target = $region25
    $region24: #{tpu_custom_call.1} parent=1 // pred_region
      %453 = dma.done [#allocation4], 128
    $region25: #{tpu_custom_call.1} parent=1 // pred_fallthru
      _
    %454 = vsyncpa [#allocation3], 1
    %455 = vsyncpa [#allocation6], 1
    %456 = vsyncpa [#allocation4], 1

</llo_original>
